<compile_context>
chip_gen: v7x
topology: tpu7x:2x2x1
jax: 0.10.0
libtpu: 0.0.40
codegen_flags: <defaults>
</compile_context>

<pallas_src>
import jax
import jax.numpy as jnp
from jax.experimental import pallas as pl
from jax.experimental.pallas import tpu as pltpu

IN_DIM = 28 * 28   # 784
HID = 200
OUT = 10
HID_PAD = 256      # lane-aligned hidden width (multiple of 128)
OUT_PAD = 128      # lane-dense output store (no masked partial vregs on a 10-wide store)


def _mlp_kernel(x_ref, w1_ref, b1_ref, w2_ref, b2_ref,
                w3_ref, b3_ref, w4_ref, b4_ref, o_ref):
    # Four MXU matmuls (bf16 in, f32 accumulate) + VPU bias-add / ReLU.
    x = x_ref[...].astype(jnp.bfloat16)        # single f32 HBM read, cast in-VMEM
    h = jnp.dot(x, w1_ref[...], preferred_element_type=jnp.float32) + b1_ref[...]
    h = jnp.maximum(h, 0.0).astype(jnp.bfloat16)
    h = jnp.dot(h, w2_ref[...], preferred_element_type=jnp.float32) + b2_ref[...]
    h = jnp.maximum(h, 0.0).astype(jnp.bfloat16)
    h = jnp.dot(h, w3_ref[...], preferred_element_type=jnp.float32) + b3_ref[...]
    h = jnp.maximum(h, 0.0).astype(jnp.bfloat16)
    out = jnp.dot(h, w4_ref[...], preferred_element_type=jnp.float32) + b4_ref[...]
    o_ref[...] = out.astype(o_ref.dtype)       # lane-dense bf16 store


def _pad_wb(w, bias, in_pad, out_pad):
    """Zero-pad a [in, out] weight and [1, out] bias to padded widths."""
    fi, fo = w.shape
    wp = jnp.pad(w, ((0, in_pad - fi), (0, out_pad - fo))).astype(jnp.bfloat16)
    bp = jnp.pad(bias, ((0, 0), (0, out_pad - fo))).astype(jnp.float32)
    return wp, bp


def pack_params(params):
    """One-time repack (call once, off the hot path): padded bf16 weights + f32 biases."""
    (w1, b1), (w2, b2), (w3, b3), (w4, b4) = params
    w1p, b1p = _pad_wb(w1, b1, IN_DIM, HID_PAD)
    w2p, b2p = _pad_wb(w2, b2, HID_PAD, HID_PAD)
    w3p, b3p = _pad_wb(w3, b3, HID_PAD, HID_PAD)
    w4p, b4p = _pad_wb(w4, b4, HID_PAD, OUT_PAD)
    return (w1p, b1p, w2p, b2p, w3p, b3p, w4p, b4p)


def _pick_tile_b(b):
    """Batch-adaptive tile: big tiles for throughput, sublane-rounded for tiny batches."""
    if b >= 4096:
        return 1024
    if b >= 1024:
        return 512          # >= 2 grid steps -> both v7x TensorCores busy
    return min(512, max(8, pl.cdiv(b, 8) * 8))


@jax.jit
def mlp_forward(x_nchw, packed_params):
    """x_nchw: [B, 1, 28, 28] float32, packed_params from pack_params -> logits [B, 10] f32."""
    w1p, b1p, w2p, b2p, w3p, b3p, w4p, b4p = packed_params
    b = x_nchw.shape[0]
    x = x_nchw.reshape(b, IN_DIM)              # torch's x.view(-1, 784); stays f32

    tile_b = _pick_tile_b(b)
    grid = (pl.cdiv(b, tile_b),)

    def rep(shape):
        # Weight/bias block: same block every grid step -> DMA'd once, VMEM-resident.
        return pl.BlockSpec(shape, lambda i: (0, 0))

    layer_macs = IN_DIM * HID_PAD + 2 * HID_PAD * HID_PAD + HID_PAD * OUT_PAD
    w_bytes = 2 * (IN_DIM * HID_PAD + 2 * HID_PAD * HID_PAD + HID_PAD * OUT_PAD)
    flops = 2 * grid[0] * tile_b * layer_macs
    bytes_accessed = (
        b * IN_DIM * 4                          # f32 activations in (single pass)
        + w_bytes                               # bf16 weights (resident)
        + 4 * (3 * HID_PAD + OUT_PAD)           # f32 biases
        + b * OUT_PAD * 2                       # bf16 logits out
    )

    out = pl.pallas_call(
        _mlp_kernel,
        out_shape=jax.ShapeDtypeStruct((b, OUT_PAD), jnp.bfloat16),
        grid=grid,
        in_specs=[
            pl.BlockSpec((tile_b, IN_DIM), lambda i: (i, 0)),   # x: tiled over batch
            rep((IN_DIM, HID_PAD)), rep((1, HID_PAD)),          # fc1
            rep((HID_PAD, HID_PAD)), rep((1, HID_PAD)),         # fc2
            rep((HID_PAD, HID_PAD)), rep((1, HID_PAD)),         # fc3
            rep((HID_PAD, OUT_PAD)), rep((1, OUT_PAD)),         # fc4
        ],
        out_specs=pl.BlockSpec((tile_b, OUT_PAD), lambda i: (i, 0)),
        compiler_params=pltpu.CompilerParams(
            dimension_semantics=("parallel",),
            vmem_limit_bytes=32 * 1024 * 1024),
        cost_estimate=pl.CostEstimate(
            flops=flops, transcendentals=0, bytes_accessed=bytes_accessed),
    )(x, w1p, b1p, w2p, b2p, w3p, b3p, w4p, b4p)

    return out[:, :OUT].astype(jnp.float32)


def _init_linear(key, fan_in, fan_out):
    # Matches nn.Linear default init: U(-1/sqrt(fan_in), 1/sqrt(fan_in)).
    kw, kb = jax.random.split(key)
    bound = 1.0 / (fan_in ** 0.5)
    # Stored as [in, out] (transposed vs PyTorch's [out, in]).
    w = jax.random.uniform(kw, (fan_in, fan_out), jnp.float32, -bound, bound)
    bias = jax.random.uniform(kb, (1, fan_out), jnp.float32, -bound, bound)
    return w, bias


def init_params(key):
    k1, k2, k3, k4 = jax.random.split(key, 4)
    return (
        _init_linear(k1, IN_DIM, HID),
        _init_linear(k2, HID, HID),
        _init_linear(k3, HID, HID),
        _init_linear(k4, HID, OUT),
    )


if __name__ == "__main__":
    key = jax.random.PRNGKey(0)
    k_params, k_x = jax.random.split(key)

    params = init_params(k_params)
    packed = pack_params(params)           # one-time repack, outside the hot path
    # Small NCHW batch consistent with the module's implied MNIST input.
    x = jax.random.normal(k_x, (8, 1, 28, 28), jnp.float32)

    logits = mlp_forward(x, packed)
    jax.block_until_ready(logits)

    # Plain-JAX f32 reference of the same forward.
    def ref(x_nchw):
        h = x_nchw.reshape(x_nchw.shape[0], -1)
        (w1, b1), (w2, b2), (w3, b3), (w4, b4) = params
        h = jnp.maximum(h @ w1 + b1, 0.0)
        h = jnp.maximum(h @ w2 + b2, 0.0)
        h = jnp.maximum(h @ w3 + b3, 0.0)
        return h @ w4 + b4

    expected = ref(x)
    assert logits.shape == (8, OUT)
    # bf16 matmul inputs / bf16 logits store with f32 accumulation -> loosened tolerance.
    assert jnp.allclose(logits, expected, atol=4e-2, rtol=4e-2)

    print("KERNEL_OK")
</pallas_src>

<mosaic_0001>
module attributes {stable_mosaic.version = 11 : i64} {
  func.func @_mlp_kernel(%arg0: i32, %arg1: memref<8x784xf32, #tpu.memory_space<vmem>>, %arg2: memref<784x256xbf16, #tpu.memory_space<vmem>>, %arg3: memref<1x256xf32, #tpu.memory_space<vmem>>, %arg4: memref<256x256xbf16, #tpu.memory_space<vmem>>, %arg5: memref<1x256xf32, #tpu.memory_space<vmem>>, %arg6: memref<256x256xbf16, #tpu.memory_space<vmem>>, %arg7: memref<1x256xf32, #tpu.memory_space<vmem>>, %arg8: memref<256x128xbf16, #tpu.memory_space<vmem>>, %arg9: memref<1x128xf32, #tpu.memory_space<vmem>>, %arg10: memref<8x128xbf16, #tpu.memory_space<vmem>>) attributes {dimension_semantics = [#tpu.dimension_semantics<parallel>], iteration_bounds = array<i64: 1>, scalar_prefetch = 0 : i64, scratch_operands = 0 : i64, tpu.core_type = #tpu.core_type<tc>, window_params = [{transform_indices = @transform_0, window_bounds = array<i64: 8, 784>}, {pipeline_mode = #tpu.pipeline_mode<synchronous>, transform_indices = @transform_1, window_bounds = array<i64: 784, 256>}, {pipeline_mode = #tpu.pipeline_mode<synchronous>, transform_indices = @transform_2, window_bounds = array<i64: 1, 256>}, {pipeline_mode = #tpu.pipeline_mode<synchronous>, transform_indices = @transform_3, window_bounds = array<i64: 256, 256>}, {pipeline_mode = #tpu.pipeline_mode<synchronous>, transform_indices = @transform_4, window_bounds = array<i64: 1, 256>}, {pipeline_mode = #tpu.pipeline_mode<synchronous>, transform_indices = @transform_5, window_bounds = array<i64: 256, 256>}, {pipeline_mode = #tpu.pipeline_mode<synchronous>, transform_indices = @transform_6, window_bounds = array<i64: 1, 256>}, {pipeline_mode = #tpu.pipeline_mode<synchronous>, transform_indices = @transform_7, window_bounds = array<i64: 256, 128>}, {pipeline_mode = #tpu.pipeline_mode<synchronous>, transform_indices = @transform_8, window_bounds = array<i64: 1, 128>}, {transform_indices = @transform_9, window_bounds = array<i64: 8, 128>}]} {
    %c0 = arith.constant 0 : index
    %c0_0 = arith.constant 0 : index
    %0 = vector.load %arg1[%c0, %c0_0] : memref<8x784xf32, #tpu.memory_space<vmem>>, vector<8x784xf32>
    %1 = arith.truncf %0 : vector<8x784xf32> to vector<8x784xbf16>
    %c0_1 = arith.constant 0 : index
    %c0_2 = arith.constant 0 : index
    %2 = vector.load %arg2[%c0_1, %c0_2] : memref<784x256xbf16, #tpu.memory_space<vmem>>, vector<784x256xbf16>
    %cst = arith.constant dense<0.000000e+00> : vector<8x256xf32>
    %3 = tpu.matmul %1, %2, %cst {dimension_numbers = #tpu.dot_dimension_numbers<[1], [0], [0], [1], [0, 0, 1, 1], [], []>} : vector<8x784xbf16>, vector<784x256xbf16>, vector<8x256xf32> -> vector<8x256xf32>
    %c0_3 = arith.constant 0 : index
    %c0_4 = arith.constant 0 : index
    %4 = vector.load %arg3[%c0_3, %c0_4] : memref<1x256xf32, #tpu.memory_space<vmem>>, vector<1x256xf32>
    %5 = vector.broadcast %4 : vector<1x256xf32> to vector<8x256xf32>
    %6 = arith.addf %3, %5 : vector<8x256xf32>
    %cst_5 = arith.constant 0.000000e+00 : f32
    %7 = vector.broadcast %cst_5 : f32 to vector<8x256xf32>
    %8 = arith.maximumf %6, %7 : vector<8x256xf32>
    %9 = arith.truncf %8 : vector<8x256xf32> to vector<8x256xbf16>
    %c0_6 = arith.constant 0 : index
    %c0_7 = arith.constant 0 : index
    %10 = vector.load %arg4[%c0_6, %c0_7] : memref<256x256xbf16, #tpu.memory_space<vmem>>, vector<256x256xbf16>
    %cst_8 = arith.constant dense<0.000000e+00> : vector<8x256xf32>
    %11 = tpu.matmul %9, %10, %cst_8 {dimension_numbers = #tpu.dot_dimension_numbers<[1], [0], [0], [1], [0, 0, 1, 1], [], []>} : vector<8x256xbf16>, vector<256x256xbf16>, vector<8x256xf32> -> vector<8x256xf32>
    %c0_9 = arith.constant 0 : index
    %c0_10 = arith.constant 0 : index
    %12 = vector.load %arg5[%c0_9, %c0_10] : memref<1x256xf32, #tpu.memory_space<vmem>>, vector<1x256xf32>
    %13 = vector.broadcast %12 : vector<1x256xf32> to vector<8x256xf32>
    %14 = arith.addf %11, %13 : vector<8x256xf32>
    %cst_11 = arith.constant 0.000000e+00 : f32
    %15 = vector.broadcast %cst_11 : f32 to vector<8x256xf32>
    %16 = arith.maximumf %14, %15 : vector<8x256xf32>
    %17 = arith.truncf %16 : vector<8x256xf32> to vector<8x256xbf16>
    %c0_12 = arith.constant 0 : index
    %c0_13 = arith.constant 0 : index
    %18 = vector.load %arg6[%c0_12, %c0_13] : memref<256x256xbf16, #tpu.memory_space<vmem>>, vector<256x256xbf16>
    %cst_14 = arith.constant dense<0.000000e+00> : vector<8x256xf32>
    %19 = tpu.matmul %17, %18, %cst_14 {dimension_numbers = #tpu.dot_dimension_numbers<[1], [0], [0], [1], [0, 0, 1, 1], [], []>} : vector<8x256xbf16>, vector<256x256xbf16>, vector<8x256xf32> -> vector<8x256xf32>
    %c0_15 = arith.constant 0 : index
    %c0_16 = arith.constant 0 : index
    %20 = vector.load %arg7[%c0_15, %c0_16] : memref<1x256xf32, #tpu.memory_space<vmem>>, vector<1x256xf32>
    %21 = vector.broadcast %20 : vector<1x256xf32> to vector<8x256xf32>
    %22 = arith.addf %19, %21 : vector<8x256xf32>
    %cst_17 = arith.constant 0.000000e+00 : f32
    %23 = vector.broadcast %cst_17 : f32 to vector<8x256xf32>
    %24 = arith.maximumf %22, %23 : vector<8x256xf32>
    %25 = arith.truncf %24 : vector<8x256xf32> to vector<8x256xbf16>
    %c0_18 = arith.constant 0 : index
    %c0_19 = arith.constant 0 : index
    %26 = vector.load %arg8[%c0_18, %c0_19] : memref<256x128xbf16, #tpu.memory_space<vmem>>, vector<256x128xbf16>
    %cst_20 = arith.constant dense<0.000000e+00> : vector<8x128xf32>
    %27 = tpu.matmul %25, %26, %cst_20 {dimension_numbers = #tpu.dot_dimension_numbers<[1], [0], [0], [1], [0, 0, 1, 1], [], []>} : vector<8x256xbf16>, vector<256x128xbf16>, vector<8x128xf32> -> vector<8x128xf32>
    %c0_21 = arith.constant 0 : index
    %c0_22 = arith.constant 0 : index
    %28 = vector.load %arg9[%c0_21, %c0_22] : memref<1x128xf32, #tpu.memory_space<vmem>>, vector<1x128xf32>
    %29 = vector.broadcast %28 : vector<1x128xf32> to vector<8x128xf32>
    %30 = arith.addf %27, %29 : vector<8x128xf32>
    %31 = arith.truncf %30 : vector<8x128xf32> to vector<8x128xbf16>
    %c0_23 = arith.constant 0 : index
    %c0_24 = arith.constant 0 : index
    %32 = vector.load %arg10[%c0_23, %c0_24] : memref<8x128xbf16, #tpu.memory_space<vmem>>, vector<8x128xbf16>
    tpu.vector_store %arg10[%c0_23, %c0_24], %31 {strides = array<i32>} : memref<8x128xbf16, #tpu.memory_space<vmem>>, vector<8x128xbf16>,
    return
  }
  func.func @transform_0(%arg0: i32) -> (i32, i32) {
    %c0_i32 = arith.constant 0 : i32
    %c0_i32_0 = arith.constant 0 : i32
    return %arg0, %c0_i32 : i32, i32
  }
  func.func @transform_1(%arg0: i32) -> (i32, i32) {
    %c0_i32 = arith.constant 0 : i32
    %c0_i32_0 = arith.constant 0 : i32
    %c0_i32_1 = arith.constant 0 : i32
    return %c0_i32, %c0_i32_0 : i32, i32
  }
  func.func @transform_2(%arg0: i32) -> (i32, i32) {
    %c0_i32 = arith.constant 0 : i32
    %c0_i32_0 = arith.constant 0 : i32
    %c0_i32_1 = arith.constant 0 : i32
    return %c0_i32, %c0_i32_0 : i32, i32
  }
  func.func @transform_3(%arg0: i32) -> (i32, i32) {
    %c0_i32 = arith.constant 0 : i32
    %c0_i32_0 = arith.constant 0 : i32
    %c0_i32_1 = arith.constant 0 : i32
    return %c0_i32, %c0_i32_0 : i32, i32
  }
  func.func @transform_4(%arg0: i32) -> (i32, i32) {
    %c0_i32 = arith.constant 0 : i32
    %c0_i32_0 = arith.constant 0 : i32
    %c0_i32_1 = arith.constant 0 : i32
    return %c0_i32, %c0_i32_0 : i32, i32
  }
  func.func @transform_5(%arg0: i32) -> (i32, i32) {
    %c0_i32 = arith.constant 0 : i32
    %c0_i32_0 = arith.constant 0 : i32
    %c0_i32_1 = arith.constant 0 : i32
    return %c0_i32, %c0_i32_0 : i32, i32
  }
  func.func @transform_6(%arg0: i32) -> (i32, i32) {
    %c0_i32 = arith.constant 0 : i32
    %c0_i32_0 = arith.constant 0 : i32
    %c0_i32_1 = arith.constant 0 : i32
    return %c0_i32, %c0_i32_0 : i32, i32
  }
  func.func @transform_7(%arg0: i32) -> (i32, i32) {
    %c0_i32 = arith.constant 0 : i32
    %c0_i32_0 = arith.constant 0 : i32
    %c0_i32_1 = arith.constant 0 : i32
    return %c0_i32, %c0_i32_0 : i32, i32
  }
  func.func @transform_8(%arg0: i32) -> (i32, i32) {
    %c0_i32 = arith.constant 0 : i32
    %c0_i32_0 = arith.constant 0 : i32
    %c0_i32_1 = arith.constant 0 : i32
    return %c0_i32, %c0_i32_0 : i32, i32
  }
  func.func @transform_9(%arg0: i32) -> (i32, i32) {
    %c0_i32 = arith.constant 0 : i32
    %c0_i32_0 = arith.constant 0 : i32
    return %arg0, %c0_i32 : i32, i32
  }
}

</mosaic_0001>

<llo_original>
// kernel: mlp_forward.1
$region0: #{mlp_forward.1}
  #allocation0 [shape = 'u32[]', space=smem, size = 0x4, offset = 0x4, fixed_abs, tag = 'smem constant byte address 0x4 - core index']
  #allocation1 [shape = 'u32[144,128]{1,0:T(1,128)}', space=vmem, size = 0x12000, scoped, tag = 'internal scratch']
  %s0 = inlined_call_operand.vmem [shape: f32[8,784], index: 0, kind: input, shape index: {}]
  %s1 = inlined_call_operand.vmem [shape: bf16[784,256], index: 1, kind: input, shape index: {}]
  %s2 = inlined_call_operand.vmem [shape: f32[1,256], index: 2, kind: input, shape index: {}]
  %s3 = inlined_call_operand.hbm [shape: bf16[256,256], index: 3, kind: input, shape index: {}]
  %s4 = inlined_call_operand.vmem [shape: f32[1,256], index: 4, kind: input, shape index: {}]
  %s5 = inlined_call_operand.hbm [shape: bf16[256,256], index: 5, kind: input, shape index: {}]
  %s6 = inlined_call_operand.vmem [shape: f32[1,256], index: 6, kind: input, shape index: {}]
  %s7 = inlined_call_operand.hbm [shape: bf16[256,128], index: 7, kind: input, shape index: {}]
  %s8 = inlined_call_operand.vmem [shape: f32[1,128], index: 8, kind: input, shape index: {}]
  %s9 = inlined_call_operand.vmem [shape: bf16[8,128], index: 9, kind: output, shape index: {}]
  %s10 = sld [smem:[#allocation0]]
  $region58: #{mlp_forward.1} parent=0
    _
  %s12 = ssub.s32 1, %s10
  %s13 = scalar_select 0, %s12, %s10
  $region1: #{mlp_forward.1} parent=0
    #allocation2 [shape = 'u8[131072]{0}', space=vmem, size = 0x20000, scoped, tag = 'input window, operand 3, single buffered']
    #allocation3 [shape = 's32[1]{0}', space=sflag, size = 0x4, scoped, tag = 'scoped memory for mlp_forward.1']
    #allocation4 [shape = 'u8[131072]{0}', space=vmem, size = 0x20000, scoped, tag = 'input window, operand 5, single buffered']
    #allocation5 [shape = 's32[1]{0}', space=sflag, size = 0x4, scoped, tag = 'scoped memory for mlp_forward.1']
    #allocation6 [shape = 'u8[65536]{0}', space=vmem, size = 0x10000, scoped, tag = 'input window, operand 7, single buffered']
    %14 = vsyncpa [#allocation3], 0
    %15 = vsyncpa [#allocation5], 0
    // Predicated region
    $region2: #{mlp_forward.1} parent=1 // pred_check
      _
    $region3: #{mlp_forward.1} parent=1 // pred_check_branch
      %17 = sbr.rel (0) target = $region5
    $region4: #{mlp_forward.1} parent=1 // pred_region
      _
    $region5: #{mlp_forward.1} parent=1 // pred_fallthru
      _
    // Predicated region
    $region6: #{mlp_forward.1} parent=1 // pred_check
      _
    $region7: #{mlp_forward.1} parent=1 // pred_check_branch
      %19 = sbr.rel (0) target = $region9
    $region8: #{mlp_forward.1} parent=1 // pred_region
      _
    $region9: #{mlp_forward.1} parent=1 // pred_fallthru
      _
    // Predicated region
    $region10: #{mlp_forward.1} parent=1 // pred_check
      _
    $region11: #{mlp_forward.1} parent=1 // pred_check_branch
      %21 = sbr.rel (0) target = $region13
    $region12: #{mlp_forward.1} parent=1 // pred_region
      _
    $region13: #{mlp_forward.1} parent=1 // pred_fallthru
      _
    // Predicated region
    $region14: #{mlp_forward.1} parent=1 // pred_check
      _
    $region15: #{mlp_forward.1} parent=1 // pred_check_branch
      %23 = sbr.rel (0) target = $region17
    $region16: #{mlp_forward.1} parent=1 // pred_region
      %s25 = ssub.s32 4096, 4096
      %26 = vsyncadd [#allocation3], %s25
      %s27 = sshll.u32 [#allocation2], 4
      %s28 = int_to_ptr.vmem [resolvable:$true] %s27
      %33 = dma.hbm_to_vmem [thread:$0]  %s3, 4096, %s28, [#allocation3], 128, 128, 8
    $region17: #{mlp_forward.1} parent=1 // pred_fallthru
      _
    // Predicated region
    $region18: #{mlp_forward.1} parent=1 // pred_check
      _
    $region19: #{mlp_forward.1} parent=1 // pred_check_branch
      %35 = sbr.rel (0) target = $region21
    $region20: #{mlp_forward.1} parent=1 // pred_region
      _
    $region21: #{mlp_forward.1} parent=1 // pred_fallthru
      _
    // Predicated region
    $region22: #{mlp_forward.1} parent=1 // pred_check
      _
    $region23: #{mlp_forward.1} parent=1 // pred_check_branch
      %37 = sbr.rel (0) target = $region25
    $region24: #{mlp_forward.1} parent=1 // pred_region
      %s39 = ssub.s32 4096, 4096
      %40 = vsyncadd [#allocation5], %s39
      %s41 = sshll.u32 [#allocation4], 4
      %s42 = int_to_ptr.vmem [resolvable:$true] %s41
      %47 = dma.hbm_to_vmem [thread:$0]  %s5, 4096, %s42, [#allocation5], 128, 128, 8
    $region25: #{mlp_forward.1} parent=1 // pred_fallthru
      _
    // Predicated region
    $region26: #{mlp_forward.1} parent=1 // pred_check
      _
    $region27: #{mlp_forward.1} parent=1 // pred_check_branch
      %49 = sbr.rel (0) target = $region29
    $region28: #{mlp_forward.1} parent=1 // pred_region
      _
    $region29: #{mlp_forward.1} parent=1 // pred_fallthru
      _
    // Predicated region
    $region30: #{mlp_forward.1} parent=1 // pred_check
      _
    $region31: #{mlp_forward.1} parent=1 // pred_check_branch
      %51 = sbr.rel (0) target = $region33
    $region32: #{mlp_forward.1} parent=1 // pred_region
      %s53 = ssub.s32 2048, 2048
      %54 = vsyncadd [#allocation5], %s53
      %s55 = sshll.u32 [#allocation6], 4
      %s56 = int_to_ptr.vmem [resolvable:$true] %s55
      %61 = dma.hbm_to_vmem [thread:$0]  %s7, 2048, %s56, [#allocation5], 64, 64, 4
    $region33: #{mlp_forward.1} parent=1 // pred_fallthru
      _
    // Predicated region
    $region34: #{mlp_forward.1} parent=1 // pred_check
      _
    $region35: #{mlp_forward.1} parent=1 // pred_check_branch
      %63 = sbr.rel (0) target = $region37
    $region36: #{mlp_forward.1} parent=1 // pred_region
      _
    $region37: #{mlp_forward.1} parent=1 // pred_fallthru
      _
    // Predicated region
    $region38: #{mlp_forward.1} parent=1 // pred_check
      _
    $region39: #{mlp_forward.1} parent=1 // pred_check_branch
      %65 = sbr.rel (0) target = $region41
    $region40: #{mlp_forward.1} parent=1 // pred_region
      %66 = dma.done [#allocation3], 4096
    $region41: #{mlp_forward.1} parent=1 // pred_fallthru
      _
    // Predicated region
    $region42: #{mlp_forward.1} parent=1 // pred_check
      _
    $region43: #{mlp_forward.1} parent=1 // pred_check_branch
      %68 = sbr.rel (0) target = $region45
    $region44: #{mlp_forward.1} parent=1 // pred_region
      %69 = dma.done [#allocation5], 4096
    $region45: #{mlp_forward.1} parent=1 // pred_fallthru
      _
    // Predicated region
    $region46: #{mlp_forward.1} parent=1 // pred_check
      _
    $region47: #{mlp_forward.1} parent=1 // pred_check_branch
      %71 = sbr.rel (0) target = $region49
    $region48: #{mlp_forward.1} parent=1 // pred_region
      %72 = dma.done [#allocation5], 2048
    $region49: #{mlp_forward.1} parent=1 // pred_fallthru
      _
    %v74 = vld [vmem:[%s0] sm:$0xff]
    %v75 = vld [vmem:[%s0 + $0x8] sm:$0xff]
    %v76 = vld [vmem:[%s0 + $0x10] sm:$0xff]
    %v77 = vld [vmem:[%s0 + $0x18] sm:$0xff]
    %v78 = vld [vmem:[%s0 + $0x20] sm:$0xff]
    %v79 = vld [vmem:[%s0 + $0x28] sm:$0xff]
    %v80 = vld [vmem:[%s0 + $0x30] sm:$0xff]
    %v81 = vpack.c.bf16 %v74, %v74
    %v82 = vpack.c.bf16 %v75, %v75
    %v83 = vpack.c.bf16 %v76, %v76
    %v84 = vpack.c.bf16 %v77, %v77
    %v85 = vpack.c.bf16 %v78, %v78
    %v86 = vpack.c.bf16 %v79, %v79
    %v87 = vpack.c.bf16 %v80, %v80
    %v88 = vld [vmem:[%s1] sm:$0xff]
    %v89 = vld [vmem:[%s1 + $0x8] sm:$0xff]
    %v90 = vld [vmem:[%s1 + $0x10] sm:$0xff]
    %v91 = vld [vmem:[%s1 + $0x18] sm:$0xff]
    %v92 = vld [vmem:[%s1 + $0x20] sm:$0xff]
    %v93 = vld [vmem:[%s1 + $0x28] sm:$0xff]
    %v94 = vld [vmem:[%s1 + $0x30] sm:$0xff]
    %v95 = vld [vmem:[%s1 + $0x38] sm:$0xff]
    %v96 = vld [vmem:[%s1 + $0x40] sm:$0xff]
    %v97 = vld [vmem:[%s1 + $0x48] sm:$0xff]
    %v98 = vld [vmem:[%s1 + $0x50] sm:$0xff]
    %v99 = vld [vmem:[%s1 + $0x58] sm:$0xff]
    %v100 = vld [vmem:[%s1 + $0x60] sm:$0xff]
    %v101 = vld [vmem:[%s1 + $0x68] sm:$0xff]
    %v102 = vld [vmem:[%s1 + $0x70] sm:$0xff]
    %v103 = vld [vmem:[%s1 + $0x78] sm:$0xff]
    %v104 = vld [vmem:[%s1 + $0x80] sm:$0xff]
    %v105 = vld [vmem:[%s1 + $0x88] sm:$0xff]
    %v106 = vld [vmem:[%s1 + $0x90] sm:$0xff]
    %v107 = vld [vmem:[%s1 + $0x98] sm:$0xff]
    %v108 = vld [vmem:[%s1 + $0xa0] sm:$0xff]
    %v109 = vld [vmem:[%s1 + $0xa8] sm:$0xff]
    %v110 = vld [vmem:[%s1 + $0xb0] sm:$0xff]
    %v111 = vld [vmem:[%s1 + $0xb8] sm:$0xff]
    %v112 = vld [vmem:[%s1 + $0xc0] sm:$0xff]
    %v113 = vld [vmem:[%s1 + $0xc8] sm:$0xff]
    %v114 = vld [vmem:[%s1 + $0xd0] sm:$0xff]
    %v115 = vld [vmem:[%s1 + $0xd8] sm:$0xff]
    %v116 = vld [vmem:[%s1 + $0xe0] sm:$0xff]
    %v117 = vld [vmem:[%s1 + $0xe8] sm:$0xff]
    %v118 = vld [vmem:[%s1 + $0xf0] sm:$0xff]
    %v119 = vld [vmem:[%s1 + $0xf8] sm:$0xff]
    %v120 = vld [vmem:[%s1 + $0x100] sm:$0xff]
    %v121 = vld [vmem:[%s1 + $0x108] sm:$0xff]
    %v122 = vld [vmem:[%s1 + $0x110] sm:$0xff]
    %v123 = vld [vmem:[%s1 + $0x118] sm:$0xff]
    %v124 = vld [vmem:[%s1 + $0x120] sm:$0xff]
    %v125 = vld [vmem:[%s1 + $0x128] sm:$0xff]
    %v126 = vld [vmem:[%s1 + $0x130] sm:$0xff]
    %v127 = vld [vmem:[%s1 + $0x138] sm:$0xff]
    %v128 = vld [vmem:[%s1 + $0x140] sm:$0xff]
    %v129 = vld [vmem:[%s1 + $0x148] sm:$0xff]
    %v130 = vld [vmem:[%s1 + $0x150] sm:$0xff]
    %v131 = vld [vmem:[%s1 + $0x158] sm:$0xff]
    %v132 = vld [vmem:[%s1 + $0x160] sm:$0xff]
    %v133 = vld [vmem:[%s1 + $0x168] sm:$0xff]
    %v134 = vld [vmem:[%s1 + $0x170] sm:$0xff]
    %v135 = vld [vmem:[%s1 + $0x178] sm:$0xff]
    %v136 = vld [vmem:[%s1 + $0x180] sm:$0xff]
    %v137 = vld [vmem:[%s1 + $0x188] sm:$0xff]
    %v138 = vld [vmem:[%s1 + $0x190] sm:$0xff]
    %v139 = vld [vmem:[%s1 + $0x198] sm:$0xff]
    %v140 = vld [vmem:[%s1 + $0x1a0] sm:$0xff]
    %v141 = vld [vmem:[%s1 + $0x1a8] sm:$0xff]
    %v142 = vld [vmem:[%s1 + $0x1b0] sm:$0xff]
    %v143 = vld [vmem:[%s1 + $0x1b8] sm:$0xff]
    %v144 = vld [vmem:[%s1 + $0x1c0] sm:$0xff]
    %v145 = vld [vmem:[%s1 + $0x1c8] sm:$0xff]
    %v146 = vld [vmem:[%s1 + $0x1d0] sm:$0xff]
    %v147 = vld [vmem:[%s1 + $0x1d8] sm:$0xff]
    %v148 = vld [vmem:[%s1 + $0x1e0] sm:$0xff]
    %v149 = vld [vmem:[%s1 + $0x1e8] sm:$0xff]
    %v150 = vld [vmem:[%s1 + $0x1f0] sm:$0xff]
    %v151 = vld [vmem:[%s1 + $0x1f8] sm:$0xff]
    %v152 = vld [vmem:[%s1 + $0x200] sm:$0xff]
    %v153 = vld [vmem:[%s1 + $0x208] sm:$0xff]
    %v154 = vld [vmem:[%s1 + $0x210] sm:$0xff]
    %v155 = vld [vmem:[%s1 + $0x218] sm:$0xff]
    %v156 = vld [vmem:[%s1 + $0x220] sm:$0xff]
    %v157 = vld [vmem:[%s1 + $0x228] sm:$0xff]
    %v158 = vld [vmem:[%s1 + $0x230] sm:$0xff]
    %v159 = vld [vmem:[%s1 + $0x238] sm:$0xff]
    %v160 = vld [vmem:[%s1 + $0x240] sm:$0xff]
    %v161 = vld [vmem:[%s1 + $0x248] sm:$0xff]
    %v162 = vld [vmem:[%s1 + $0x250] sm:$0xff]
    %v163 = vld [vmem:[%s1 + $0x258] sm:$0xff]
    %v164 = vld [vmem:[%s1 + $0x260] sm:$0xff]
    %v165 = vld [vmem:[%s1 + $0x268] sm:$0xff]
    %v166 = vld [vmem:[%s1 + $0x270] sm:$0xff]
    %v167 = vld [vmem:[%s1 + $0x278] sm:$0xff]
    %v168 = vld [vmem:[%s1 + $0x280] sm:$0xff]
    %v169 = vld [vmem:[%s1 + $0x288] sm:$0xff]
    %v170 = vld [vmem:[%s1 + $0x290] sm:$0xff]
    %v171 = vld [vmem:[%s1 + $0x298] sm:$0xff]
    %v172 = vld [vmem:[%s1 + $0x2a0] sm:$0xff]
    %v173 = vld [vmem:[%s1 + $0x2a8] sm:$0xff]
    %v174 = vld [vmem:[%s1 + $0x2b0] sm:$0xff]
    %v175 = vld [vmem:[%s1 + $0x2b8] sm:$0xff]
    %v176 = vld [vmem:[%s1 + $0x2c0] sm:$0xff]
    %v177 = vld [vmem:[%s1 + $0x2c8] sm:$0xff]
    %v178 = vld [vmem:[%s1 + $0x2d0] sm:$0xff]
    %v179 = vld [vmem:[%s1 + $0x2d8] sm:$0xff]
    %v180 = vld [vmem:[%s1 + $0x2e0] sm:$0xff]
    %v181 = vld [vmem:[%s1 + $0x2e8] sm:$0xff]
    %v182 = vld [vmem:[%s1 + $0x2f0] sm:$0xff]
    %v183 = vld [vmem:[%s1 + $0x2f8] sm:$0xff]
    %v184 = vld [vmem:[%s1 + $0x300] sm:$0xff]
    %v185 = vld [vmem:[%s1 + $0x308] sm:$0xff]
    %v186 = vld [vmem:[%s2] sm:$0x3]
    %v188 = vlaneseq
    %v189 = vshrl.u32 %v188, 7
    %v190 = vsub.s32 0, %v189
    %v191 = vrot.slane %v186, %v190
    %v192 = vlaneseq
    %v193 = vshrl.u32 %v192, 7
    %v194 = vsub.s32 1, %v193
    %v195 = vrot.slane %v186, %v194
    %v296 = vunpack.c.l.b16 %v88
    %v297 = vunpack.c.h.b16 %v88
    %v298 = vunpack.c.l.b16 %v89
    %v299 = vunpack.c.h.b16 %v89
    %v300 = vunpack.c.l.b16 %v90
    %v301 = vunpack.c.h.b16 %v90
    %v302 = vunpack.c.l.b16 %v91
    %v303 = vunpack.c.h.b16 %v91
    %v304 = vunpack.c.l.b16 %v92
    %v305 = vunpack.c.h.b16 %v92
    %v306 = vunpack.c.l.b16 %v93
    %v307 = vunpack.c.h.b16 %v93
    %v308 = vunpack.c.l.b16 %v94
    %v309 = vunpack.c.h.b16 %v94
    %v310 = vunpack.c.l.b16 %v95
    %v311 = vunpack.c.h.b16 %v95
    %v312 = vunpack.c.l.b16 %v96
    %v313 = vunpack.c.h.b16 %v96
    %v314 = vunpack.c.l.b16 %v97
    %v315 = vunpack.c.h.b16 %v97
    %v316 = vunpack.c.l.b16 %v98
    %v317 = vunpack.c.h.b16 %v98
    %v318 = vunpack.c.l.b16 %v99
    %v319 = vunpack.c.h.b16 %v99
    %v320 = vunpack.c.l.b16 %v100
    %v321 = vunpack.c.h.b16 %v100
    %v322 = vunpack.c.l.b16 %v101
    %v323 = vunpack.c.h.b16 %v101
    %v324 = vunpack.c.l.b16 %v102
    %v325 = vunpack.c.h.b16 %v102
    %v326 = vunpack.c.l.b16 %v103
    %v327 = vunpack.c.h.b16 %v103
    %v328 = vunpack.c.l.b16 %v104
    %v329 = vunpack.c.h.b16 %v104
    %v330 = vunpack.c.l.b16 %v105
    %v331 = vunpack.c.h.b16 %v105
    %v332 = vunpack.c.l.b16 %v106
    %v333 = vunpack.c.h.b16 %v106
    %v334 = vunpack.c.l.b16 %v107
    %v335 = vunpack.c.h.b16 %v107
    %v336 = vunpack.c.l.b16 %v108
    %v337 = vunpack.c.h.b16 %v108
    %v338 = vunpack.c.l.b16 %v109
    %v339 = vunpack.c.h.b16 %v109
    %v340 = vunpack.c.l.b16 %v110
    %v341 = vunpack.c.h.b16 %v110
    %v342 = vunpack.c.l.b16 %v111
    %v343 = vunpack.c.h.b16 %v111
    %v344 = vunpack.c.l.b16 %v112
    %v345 = vunpack.c.h.b16 %v112
    %v346 = vunpack.c.l.b16 %v113
    %v347 = vunpack.c.h.b16 %v113
    %v348 = vunpack.c.l.b16 %v114
    %v349 = vunpack.c.h.b16 %v114
    %v350 = vunpack.c.l.b16 %v115
    %v351 = vunpack.c.h.b16 %v115
    %v352 = vunpack.c.l.b16 %v116
    %v353 = vunpack.c.h.b16 %v116
    %v354 = vunpack.c.l.b16 %v117
    %v355 = vunpack.c.h.b16 %v117
    %v356 = vunpack.c.l.b16 %v118
    %v357 = vunpack.c.h.b16 %v118
    %v358 = vunpack.c.l.b16 %v119
    %v359 = vunpack.c.h.b16 %v119
    %v360 = vunpack.c.l.b16 %v120
    %v361 = vunpack.c.h.b16 %v120
    %v362 = vunpack.c.l.b16 %v121
    %v363 = vunpack.c.h.b16 %v121
    %v364 = vunpack.c.l.b16 %v122
    %v365 = vunpack.c.h.b16 %v122
    %v366 = vunpack.c.l.b16 %v123
    %v367 = vunpack.c.h.b16 %v123
    %v368 = vunpack.c.l.b16 %v124
    %v369 = vunpack.c.h.b16 %v124
    %v370 = vunpack.c.l.b16 %v125
    %v371 = vunpack.c.h.b16 %v125
    %v372 = vunpack.c.l.b16 %v126
    %v373 = vunpack.c.h.b16 %v126
    %v374 = vunpack.c.l.b16 %v127
    %v375 = vunpack.c.h.b16 %v127
    %v376 = vunpack.c.l.b16 %v128
    %v377 = vunpack.c.h.b16 %v128
    %v378 = vunpack.c.l.b16 %v129
    %v379 = vunpack.c.h.b16 %v129
    %v380 = vunpack.c.l.b16 %v130
    %v381 = vunpack.c.h.b16 %v130
    %v382 = vunpack.c.l.b16 %v131
    %v383 = vunpack.c.h.b16 %v131
    %v384 = vunpack.c.l.b16 %v132
    %v385 = vunpack.c.h.b16 %v132
    %v386 = vunpack.c.l.b16 %v133
    %v387 = vunpack.c.h.b16 %v133
    %v388 = vunpack.c.l.b16 %v134
    %v389 = vunpack.c.h.b16 %v134
    %v390 = vunpack.c.l.b16 %v135
    %v391 = vunpack.c.h.b16 %v135
    %v392 = vunpack.c.l.b16 %v136
    %v393 = vunpack.c.h.b16 %v136
    %v394 = vunpack.c.l.b16 %v137
    %v395 = vunpack.c.h.b16 %v137
    %v396 = vunpack.c.l.b16 %v138
    %v397 = vunpack.c.h.b16 %v138
    %v398 = vunpack.c.l.b16 %v139
    %v399 = vunpack.c.h.b16 %v139
    %v400 = vunpack.c.l.b16 %v140
    %v401 = vunpack.c.h.b16 %v140
    %v402 = vunpack.c.l.b16 %v141
    %v403 = vunpack.c.h.b16 %v141
    %v404 = vunpack.c.l.b16 %v142
    %v405 = vunpack.c.h.b16 %v142
    %v406 = vunpack.c.l.b16 %v143
    %v407 = vunpack.c.h.b16 %v143
    %v408 = vunpack.c.l.b16 %v144
    %v409 = vunpack.c.h.b16 %v144
    %v410 = vunpack.c.l.b16 %v145
    %v411 = vunpack.c.h.b16 %v145
    %v412 = vunpack.c.l.b16 %v146
    %v413 = vunpack.c.h.b16 %v146
    %v414 = vunpack.c.l.b16 %v147
    %v415 = vunpack.c.h.b16 %v147
    %v416 = vunpack.c.l.b16 %v148
    %v417 = vunpack.c.h.b16 %v148
    %v418 = vunpack.c.l.b16 %v149
    %v419 = vunpack.c.h.b16 %v149
    %v420 = vunpack.c.l.b16 %v150
    %v421 = vunpack.c.h.b16 %v150
    %v422 = vunpack.c.l.b16 %v151
    %v423 = vunpack.c.h.b16 %v151
    %v424 = vunpack.c.l.b16 %v152
    %v425 = vunpack.c.h.b16 %v152
    %v426 = vunpack.c.l.b16 %v153
    %v427 = vunpack.c.h.b16 %v153
    %v428 = vunpack.c.l.b16 %v154
    %v429 = vunpack.c.h.b16 %v154
    %v430 = vunpack.c.l.b16 %v155
    %v431 = vunpack.c.h.b16 %v155
    %v432 = vunpack.c.l.b16 %v156
    %v433 = vunpack.c.h.b16 %v156
    %v434 = vunpack.c.l.b16 %v157
    %v435 = vunpack.c.h.b16 %v157
    %v436 = vunpack.c.l.b16 %v158
    %v437 = vunpack.c.h.b16 %v158
    %v438 = vunpack.c.l.b16 %v159
    %v439 = vunpack.c.h.b16 %v159
    %v440 = vunpack.c.l.b16 %v160
    %v441 = vunpack.c.h.b16 %v160
    %v442 = vunpack.c.l.b16 %v161
    %v443 = vunpack.c.h.b16 %v161
    %v444 = vunpack.c.l.b16 %v162
    %v445 = vunpack.c.h.b16 %v162
    %v446 = vunpack.c.l.b16 %v163
    %v447 = vunpack.c.h.b16 %v163
    %v448 = vunpack.c.l.b16 %v164
    %v449 = vunpack.c.h.b16 %v164
    %v450 = vunpack.c.l.b16 %v165
    %v451 = vunpack.c.h.b16 %v165
    %v452 = vunpack.c.l.b16 %v166
    %v453 = vunpack.c.h.b16 %v166
    %v454 = vunpack.c.l.b16 %v167
    %v455 = vunpack.c.h.b16 %v167
    %v456 = vunpack.c.l.b16 %v168
    %v457 = vunpack.c.h.b16 %v168
    %v458 = vunpack.c.l.b16 %v169
    %v459 = vunpack.c.h.b16 %v169
    %v460 = vunpack.c.l.b16 %v170
    %v461 = vunpack.c.h.b16 %v170
    %v462 = vunpack.c.l.b16 %v171
    %v463 = vunpack.c.h.b16 %v171
    %v464 = vunpack.c.l.b16 %v172
    %v465 = vunpack.c.h.b16 %v172
    %v466 = vunpack.c.l.b16 %v173
    %v467 = vunpack.c.h.b16 %v173
    %v468 = vunpack.c.l.b16 %v174
    %v469 = vunpack.c.h.b16 %v174
    %v470 = vunpack.c.l.b16 %v175
    %v471 = vunpack.c.h.b16 %v175
    %v472 = vunpack.c.l.b16 %v176
    %v473 = vunpack.c.h.b16 %v176
    %v474 = vunpack.c.l.b16 %v177
    %v475 = vunpack.c.h.b16 %v177
    %v476 = vunpack.c.l.b16 %v178
    %v477 = vunpack.c.h.b16 %v178
    %v478 = vunpack.c.l.b16 %v179
    %v479 = vunpack.c.h.b16 %v179
    %v480 = vunpack.c.l.b16 %v180
    %v481 = vunpack.c.h.b16 %v180
    %v482 = vunpack.c.l.b16 %v181
    %v483 = vunpack.c.h.b16 %v181
    %v484 = vunpack.c.l.b16 %v182
    %v485 = vunpack.c.h.b16 %v182
    %v486 = vunpack.c.l.b16 %v183
    %v487 = vunpack.c.h.b16 %v183
    %v488 = vunpack.c.l.b16 %v184
    %v489 = vunpack.c.h.b16 %v184
    %v490 = vunpack.c.l.b16 %v185
    %v491 = vunpack.c.h.b16 %v185
    %v492 = vpack.c.b16 %v298, %v296
    %v493 = vpack.c.b16 %v299, %v297
    %v494 = vpack.c.b16 %v302, %v300
    %v495 = vpack.c.b16 %v303, %v301
    %v496 = vpack.c.b16 %v306, %v304
    %v497 = vpack.c.b16 %v307, %v305
    %v498 = vpack.c.b16 %v310, %v308
    %v499 = vpack.c.b16 %v311, %v309
    %v500 = vpack.c.b16 %v314, %v312
    %v501 = vpack.c.b16 %v315, %v313
    %v502 = vpack.c.b16 %v318, %v316
    %v503 = vpack.c.b16 %v319, %v317
    %v504 = vpack.c.b16 %v322, %v320
    %v505 = vpack.c.b16 %v323, %v321
    %v506 = vpack.c.b16 %v326, %v324
    %v507 = vpack.c.b16 %v327, %v325
    %v508 = vpack.c.b16 %v330, %v328
    %v509 = vpack.c.b16 %v331, %v329
    %v510 = vpack.c.b16 %v334, %v332
    %v511 = vpack.c.b16 %v335, %v333
    %v512 = vpack.c.b16 %v338, %v336
    %v513 = vpack.c.b16 %v339, %v337
    %v514 = vpack.c.b16 %v342, %v340
    %v515 = vpack.c.b16 %v343, %v341
    %v516 = vpack.c.b16 %v346, %v344
    %v517 = vpack.c.b16 %v347, %v345
    %v518 = vpack.c.b16 %v350, %v348
    %v519 = vpack.c.b16 %v351, %v349
    %v520 = vpack.c.b16 %v354, %v352
    %v521 = vpack.c.b16 %v355, %v353
    %v522 = vpack.c.b16 %v358, %v356
    %v523 = vpack.c.b16 %v359, %v357
    %v524 = vpack.c.b16 %v362, %v360
    %v525 = vpack.c.b16 %v363, %v361
    %v526 = vpack.c.b16 %v366, %v364
    %v527 = vpack.c.b16 %v367, %v365
    %v528 = vpack.c.b16 %v370, %v368
    %v529 = vpack.c.b16 %v371, %v369
    %v530 = vpack.c.b16 %v374, %v372
    %v531 = vpack.c.b16 %v375, %v373
    %v532 = vpack.c.b16 %v378, %v376
    %v533 = vpack.c.b16 %v379, %v377
    %v534 = vpack.c.b16 %v382, %v380
    %v535 = vpack.c.b16 %v383, %v381
    %v536 = vpack.c.b16 %v386, %v384
    %v537 = vpack.c.b16 %v387, %v385
    %v538 = vpack.c.b16 %v390, %v388
    %v539 = vpack.c.b16 %v391, %v389
    %v540 = vpack.c.b16 %v394, %v392
    %v541 = vpack.c.b16 %v395, %v393
    %v542 = vpack.c.b16 %v398, %v396
    %v543 = vpack.c.b16 %v399, %v397
    %v544 = vpack.c.b16 %v402, %v400
    %v545 = vpack.c.b16 %v403, %v401
    %v546 = vpack.c.b16 %v406, %v404
    %v547 = vpack.c.b16 %v407, %v405
    %v548 = vpack.c.b16 %v410, %v408
    %v549 = vpack.c.b16 %v411, %v409
    %v550 = vpack.c.b16 %v414, %v412
    %v551 = vpack.c.b16 %v415, %v413
    %v552 = vpack.c.b16 %v418, %v416
    %v553 = vpack.c.b16 %v419, %v417
    %v554 = vpack.c.b16 %v422, %v420
    %v555 = vpack.c.b16 %v423, %v421
    %v556 = vpack.c.b16 %v426, %v424
    %v557 = vpack.c.b16 %v427, %v425
    %v558 = vpack.c.b16 %v430, %v428
    %v559 = vpack.c.b16 %v431, %v429
    %v560 = vpack.c.b16 %v434, %v432
    %v561 = vpack.c.b16 %v435, %v433
    %v562 = vpack.c.b16 %v438, %v436
    %v563 = vpack.c.b16 %v439, %v437
    %v564 = vpack.c.b16 %v442, %v440
    %v565 = vpack.c.b16 %v443, %v441
    %v566 = vpack.c.b16 %v446, %v444
    %v567 = vpack.c.b16 %v447, %v445
    %v568 = vpack.c.b16 %v450, %v448
    %v569 = vpack.c.b16 %v451, %v449
    %v570 = vpack.c.b16 %v454, %v452
    %v571 = vpack.c.b16 %v455, %v453
    %v572 = vpack.c.b16 %v458, %v456
    %v573 = vpack.c.b16 %v459, %v457
    %v574 = vpack.c.b16 %v462, %v460
    %v575 = vpack.c.b16 %v463, %v461
    %v576 = vpack.c.b16 %v466, %v464
    %v577 = vpack.c.b16 %v467, %v465
    %v578 = vpack.c.b16 %v470, %v468
    %v579 = vpack.c.b16 %v471, %v469
    %v580 = vpack.c.b16 %v474, %v472
    %v581 = vpack.c.b16 %v475, %v473
    %v582 = vpack.c.b16 %v478, %v476
    %v583 = vpack.c.b16 %v479, %v477
    %v584 = vpack.c.b16 %v482, %v480
    %v585 = vpack.c.b16 %v483, %v481
    %v586 = vpack.c.b16 %v486, %v484
    %v587 = vpack.c.b16 %v487, %v485
    %v588 = vpack.c.b16 %v490, %v488
    %v589 = vpack.c.b16 %v491, %v489
    %vm688 = vcmask 130048
    %v690 = vsel %vm688, %v87, 0
    %692 = vmatprep.subr.bf16.mxu0 %v493
    %693 = vmatpush1.bf16.msra.mxu0 %v492
    %694 = vmatprep.subr.bf16.mxu0 %v495
    %695 = vmatpush1.bf16.msra.mxu0 %v494
    %696 = vmatprep.subr.bf16.mxu0 %v497
    %697 = vmatpush1.bf16.msra.mxu0 %v496
    %698 = vmatprep.subr.bf16.mxu0 %v499
    %699 = vmatpush1.bf16.msra.mxu0 %v498
    %700 = vmatprep.subr.bf16.mxu0 %v501
    %701 = vmatpush1.bf16.msra.mxu0 %v500
    %702 = vmatprep.subr.bf16.mxu0 %v503
    %703 = vmatpush1.bf16.msra.mxu0 %v502
    %704 = vmatprep.subr.bf16.mxu0 %v505
    %705 = vmatpush1.bf16.msra.mxu0 %v504
    %706 = vmatprep.subr.bf16.mxu0 %v507
    %707 = vmatpush1.bf16.msra.mxu0 %v506
    %708 = vmatprep.subr.bf16.mxu0 %v509
    %709 = vmatpush1.bf16.msra.mxu0 %v508
    %710 = vmatprep.subr.bf16.mxu0 %v511
    %711 = vmatpush1.bf16.msra.mxu0 %v510
    %712 = vmatprep.subr.bf16.mxu0 %v513
    %713 = vmatpush1.bf16.msra.mxu0 %v512
    %714 = vmatprep.subr.bf16.mxu0 %v515
    %715 = vmatpush1.bf16.msra.mxu0 %v514
    %716 = vmatprep.subr.bf16.mxu0 %v517
    %717 = vmatpush1.bf16.msra.mxu0 %v516
    %718 = vmatprep.subr.bf16.mxu0 %v519
    %719 = vmatpush1.bf16.msra.mxu0 %v518
    %720 = vmatprep.subr.bf16.mxu0 %v521
    %721 = vmatpush1.bf16.msra.mxu0 %v520
    %722 = vmatprep.subr.bf16.mxu0 %v523
    %723 = vmatpush1.bf16.msra.mxu0 %v522
    %724 = vmatprep.mubr.bf16.mxu0 %v82
    %725 = vmatmul.mubr.bf16.gmra.mrb[0].mxu0 %v81
    %v726 = vpop.f32.mrb[0].mxu0
    %v727 = vadd.f32 %v191, %v726
    %v728 = vpop.f32.mrb[0].mxu0
    %v729 = vadd.f32 %v195, %v728
    %v730 = vpop.f32.mrb[0].mxu0
    %v731 = vpop.f32.mrb[0].mxu0
    %732 = vdwg.mxu0
    %733 = vmatprep.subr.bf16.mxu0 %v525
    %734 = vmatpush1.bf16.msra.mxu0 %v524
    %735 = vmatprep.subr.bf16.mxu0 %v527
    %736 = vmatpush1.bf16.msra.mxu0 %v526
    %737 = vmatprep.subr.bf16.mxu0 %v529
    %738 = vmatpush1.bf16.msra.mxu0 %v528
    %739 = vmatprep.subr.bf16.mxu0 %v531
    %740 = vmatpush1.bf16.msra.mxu0 %v530
    %741 = vmatprep.subr.bf16.mxu0 %v533
    %742 = vmatpush1.bf16.msra.mxu0 %v532
    %743 = vmatprep.subr.bf16.mxu0 %v535
    %744 = vmatpush1.bf16.msra.mxu0 %v534
    %745 = vmatprep.subr.bf16.mxu0 %v537
    %746 = vmatpush1.bf16.msra.mxu0 %v536
    %747 = vmatprep.subr.bf16.mxu0 %v539
    %748 = vmatpush1.bf16.msra.mxu0 %v538
    %749 = vmatprep.subr.bf16.mxu0 %v541
    %750 = vmatpush1.bf16.msra.mxu0 %v540
    %751 = vmatprep.subr.bf16.mxu0 %v543
    %752 = vmatpush1.bf16.msra.mxu0 %v542
    %753 = vmatprep.subr.bf16.mxu0 %v545
    %754 = vmatpush1.bf16.msra.mxu0 %v544
    %755 = vmatprep.subr.bf16.mxu0 %v547
    %756 = vmatpush1.bf16.msra.mxu0 %v546
    %757 = vmatprep.subr.bf16.mxu0 %v549
    %758 = vmatpush1.bf16.msra.mxu0 %v548
    %759 = vmatprep.subr.bf16.mxu0 %v551
    %760 = vmatpush1.bf16.msra.mxu0 %v550
    %761 = vmatprep.subr.bf16.mxu0 %v553
    %762 = vmatpush1.bf16.msra.mxu0 %v552
    %763 = vmatprep.subr.bf16.mxu0 %v555
    %764 = vmatpush1.bf16.msra.mxu0 %v554
    %765 = vmatprep.mubr.bf16.mxu0 %v84
    %766 = vmatmul.mubr.bf16.gmra.mrb[0].mxu0 %v83
    %v767 = vpop.f32.mrb[0].mxu0
    %v768 = vadd.f32 %v727, %v767
    %v769 = vpop.f32.mrb[0].mxu0
    %v770 = vadd.f32 %v729, %v769
    %v771 = vpop.f32.mrb[0].mxu0
    %v772 = vpop.f32.mrb[0].mxu0
    %773 = vdwg.mxu0
    %774 = vmatprep.subr.bf16.mxu0 %v557
    %775 = vmatpush1.bf16.msra.mxu0 %v556
    %776 = vmatprep.subr.bf16.mxu0 %v559
    %777 = vmatpush1.bf16.msra.mxu0 %v558
    %778 = vmatprep.subr.bf16.mxu0 %v561
    %779 = vmatpush1.bf16.msra.mxu0 %v560
    %780 = vmatprep.subr.bf16.mxu0 %v563
    %781 = vmatpush1.bf16.msra.mxu0 %v562
    %782 = vmatprep.subr.bf16.mxu0 %v565
    %783 = vmatpush1.bf16.msra.mxu0 %v564
    %784 = vmatprep.subr.bf16.mxu0 %v567
    %785 = vmatpush1.bf16.msra.mxu0 %v566
    %786 = vmatprep.subr.bf16.mxu0 %v569
    %787 = vmatpush1.bf16.msra.mxu0 %v568
    %788 = vmatprep.subr.bf16.mxu0 %v571
    %789 = vmatpush1.bf16.msra.mxu0 %v570
    %790 = vmatprep.subr.bf16.mxu0 %v573
    %791 = vmatpush1.bf16.msra.mxu0 %v572
    %792 = vmatprep.subr.bf16.mxu0 %v575
    %793 = vmatpush1.bf16.msra.mxu0 %v574
    %794 = vmatprep.subr.bf16.mxu0 %v577
    %795 = vmatpush1.bf16.msra.mxu0 %v576
    %796 = vmatprep.subr.bf16.mxu0 %v579
    %797 = vmatpush1.bf16.msra.mxu0 %v578
    %798 = vmatprep.subr.bf16.mxu0 %v581
    %799 = vmatpush1.bf16.msra.mxu0 %v580
    %800 = vmatprep.subr.bf16.mxu0 %v583
    %801 = vmatpush1.bf16.msra.mxu0 %v582
    %802 = vmatprep.subr.bf16.mxu0 %v585
    %803 = vmatpush1.bf16.msra.mxu0 %v584
    %804 = vmatprep.subr.bf16.mxu0 %v587
    %805 = vmatpush1.bf16.msra.mxu0 %v586
    %806 = vmatprep.mubr.bf16.mxu0 %v86
    %807 = vmatmul.mubr.bf16.gmra.mrb[0].mxu0 %v85
    %v808 = vpop.f32.mrb[0].mxu0
    %v809 = vadd.f32 %v768, %v808
    %v810 = vpop.f32.mrb[0].mxu0
    %v811 = vadd.f32 %v770, %v810
    %v812 = vpop.f32.mrb[0].mxu0
    %v813 = vpop.f32.mrb[0].mxu0
    %814 = vdwg.mxu0
    %815 = vmatprep.subr.bf16.mxu0 %v589
    %816 = vmatpush1.bf16.msra.mxu0 %v588
    %817 = vmatprep.subr.bf16.mxu0 0
    %818 = vmatpush1.bf16.msra.mxu0 0
    %819 = vmatprep.subr.bf16.mxu0 0
    %820 = vmatpush1.bf16.msra.mxu0 0
    %821 = vmatprep.subr.bf16.mxu0 0
    %822 = vmatpush1.bf16.msra.mxu0 0
    %823 = vmatprep.subr.bf16.mxu0 0
    %824 = vmatpush1.bf16.msra.mxu0 0
    %825 = vmatprep.subr.bf16.mxu0 0
    %826 = vmatpush1.bf16.msra.mxu0 0
    %827 = vmatprep.subr.bf16.mxu0 0
    %828 = vmatpush1.bf16.msra.mxu0 0
    %829 = vmatprep.subr.bf16.mxu0 0
    %830 = vmatpush1.bf16.msra.mxu0 0
    %831 = vmatprep.subr.bf16.mxu0 0
    %832 = vmatpush1.bf16.msra.mxu0 0
    %833 = vmatprep.subr.bf16.mxu0 0
    %834 = vmatpush1.bf16.msra.mxu0 0
    %835 = vmatprep.subr.bf16.mxu0 0
    %836 = vmatpush1.bf16.msra.mxu0 0
    %837 = vmatprep.subr.bf16.mxu0 0
    %838 = vmatpush1.bf16.msra.mxu0 0
    %839 = vmatprep.subr.bf16.mxu0 0
    %840 = vmatpush1.bf16.msra.mxu0 0
    %841 = vmatprep.subr.bf16.mxu0 0
    %842 = vmatpush1.bf16.msra.mxu0 0
    %843 = vmatprep.subr.bf16.mxu0 0
    %844 = vmatpush1.bf16.msra.mxu0 0
    %845 = vmatprep.subr.bf16.mxu0 0
    %846 = vmatpush1.bf16.msra.mxu0 0
    %847 = vmatprep.mubr.bf16.mxu0 0
    %848 = vmatmul.mubr.bf16.gmra.mrb[0].mxu0 %v690
    %v849 = vpop.f32.mrb[0].mxu0
    %v850 = vadd.f32 %v809, %v849
    %v851 = vpop.f32.mrb[0].mxu0
    %v852 = vadd.f32 %v811, %v851
    %v853 = vpop.f32.mrb[0].mxu0
    %v854 = vpop.f32.mrb[0].mxu0
    %855 = vdwg.mxu0
    %v856 = vmax.f32 %v850, 0.0
    %v857 = vmax.f32 %v852, 0.0
    %v858 = vpack.c.bf16 %v856, %v856
    %v859 = vpack.c.bf16 %v857, %v857
    %v860 = vld [vmem:[#allocation2] sm:$0xff]
    %v861 = vld [vmem:[#allocation2 + $0x8] sm:$0xff]
    %v862 = vld [vmem:[#allocation2 + $0x10] sm:$0xff]
    %v863 = vld [vmem:[#allocation2 + $0x18] sm:$0xff]
    %v864 = vld [vmem:[#allocation2 + $0x20] sm:$0xff]
    %v865 = vld [vmem:[#allocation2 + $0x28] sm:$0xff]
    %v866 = vld [vmem:[#allocation2 + $0x30] sm:$0xff]
    %v867 = vld [vmem:[#allocation2 + $0x38] sm:$0xff]
    %v868 = vld [vmem:[#allocation2 + $0x40] sm:$0xff]
    %v869 = vld [vmem:[#allocation2 + $0x48] sm:$0xff]
    %v870 = vld [vmem:[#allocation2 + $0x50] sm:$0xff]
    %v871 = vld [vmem:[#allocation2 + $0x58] sm:$0xff]
    %v872 = vld [vmem:[#allocation2 + $0x60] sm:$0xff]
    %v873 = vld [vmem:[#allocation2 + $0x68] sm:$0xff]
    %v874 = vld [vmem:[#allocation2 + $0x70] sm:$0xff]
    %v875 = vld [vmem:[#allocation2 + $0x78] sm:$0xff]
    %v876 = vld [vmem:[#allocation2 + $0x80] sm:$0xff]
    %v877 = vld [vmem:[#allocation2 + $0x88] sm:$0xff]
    %v878 = vld [vmem:[#allocation2 + $0x90] sm:$0xff]
    %v879 = vld [vmem:[#allocation2 + $0x98] sm:$0xff]
    %v880 = vld [vmem:[#allocation2 + $0xa0] sm:$0xff]
    %v881 = vld [vmem:[#allocation2 + $0xa8] sm:$0xff]
    %v882 = vld [vmem:[#allocation2 + $0xb0] sm:$0xff]
    %v883 = vld [vmem:[#allocation2 + $0xb8] sm:$0xff]
    %v884 = vld [vmem:[#allocation2 + $0xc0] sm:$0xff]
    %v885 = vld [vmem:[#allocation2 + $0xc8] sm:$0xff]
    %v886 = vld [vmem:[#allocation2 + $0xd0] sm:$0xff]
    %v887 = vld [vmem:[#allocation2 + $0xd8] sm:$0xff]
    %v888 = vld [vmem:[#allocation2 + $0xe0] sm:$0xff]
    %v889 = vld [vmem:[#allocation2 + $0xe8] sm:$0xff]
    %v890 = vld [vmem:[#allocation2 + $0xf0] sm:$0xff]
    %v891 = vld [vmem:[#allocation2 + $0xf8] sm:$0xff]
    %v892 = vld [vmem:[%s4] sm:$0x3]
    %v894 = vlaneseq
    %v895 = vshrl.u32 %v894, 7
    %v896 = vsub.s32 0, %v895
    %v897 = vrot.slane %v892, %v896
    %v898 = vlaneseq
    %v899 = vshrl.u32 %v898, 7
    %v900 = vsub.s32 1, %v899
    %v901 = vrot.slane %v892, %v900
    %v936 = vunpack.c.l.b16 %v860
    %v937 = vunpack.c.h.b16 %v860
    %v938 = vunpack.c.l.b16 %v861
    %v939 = vunpack.c.h.b16 %v861
    %v940 = vunpack.c.l.b16 %v862
    %v941 = vunpack.c.h.b16 %v862
    %v942 = vunpack.c.l.b16 %v863
    %v943 = vunpack.c.h.b16 %v863
    %v944 = vunpack.c.l.b16 %v864
    %v945 = vunpack.c.h.b16 %v864
    %v946 = vunpack.c.l.b16 %v865
    %v947 = vunpack.c.h.b16 %v865
    %v948 = vunpack.c.l.b16 %v866
    %v949 = vunpack.c.h.b16 %v866
    %v950 = vunpack.c.l.b16 %v867
    %v951 = vunpack.c.h.b16 %v867
    %v952 = vunpack.c.l.b16 %v868
    %v953 = vunpack.c.h.b16 %v868
    %v954 = vunpack.c.l.b16 %v869
    %v955 = vunpack.c.h.b16 %v869
    %v956 = vunpack.c.l.b16 %v870
    %v957 = vunpack.c.h.b16 %v870
    %v958 = vunpack.c.l.b16 %v871
    %v959 = vunpack.c.h.b16 %v871
    %v960 = vunpack.c.l.b16 %v872
    %v961 = vunpack.c.h.b16 %v872
    %v962 = vunpack.c.l.b16 %v873
    %v963 = vunpack.c.h.b16 %v873
    %v964 = vunpack.c.l.b16 %v874
    %v965 = vunpack.c.h.b16 %v874
    %v966 = vunpack.c.l.b16 %v875
    %v967 = vunpack.c.h.b16 %v875
    %v968 = vunpack.c.l.b16 %v876
    %v969 = vunpack.c.h.b16 %v876
    %v970 = vunpack.c.l.b16 %v877
    %v971 = vunpack.c.h.b16 %v877
    %v972 = vunpack.c.l.b16 %v878
    %v973 = vunpack.c.h.b16 %v878
    %v974 = vunpack.c.l.b16 %v879
    %v975 = vunpack.c.h.b16 %v879
    %v976 = vunpack.c.l.b16 %v880
    %v977 = vunpack.c.h.b16 %v880
    %v978 = vunpack.c.l.b16 %v881
    %v979 = vunpack.c.h.b16 %v881
    %v980 = vunpack.c.l.b16 %v882
    %v981 = vunpack.c.h.b16 %v882
    %v982 = vunpack.c.l.b16 %v883
    %v983 = vunpack.c.h.b16 %v883
    %v984 = vunpack.c.l.b16 %v884
    %v985 = vunpack.c.h.b16 %v884
    %v986 = vunpack.c.l.b16 %v885
    %v987 = vunpack.c.h.b16 %v885
    %v988 = vunpack.c.l.b16 %v886
    %v989 = vunpack.c.h.b16 %v886
    %v990 = vunpack.c.l.b16 %v887
    %v991 = vunpack.c.h.b16 %v887
    %v992 = vunpack.c.l.b16 %v888
    %v993 = vunpack.c.h.b16 %v888
    %v994 = vunpack.c.l.b16 %v889
    %v995 = vunpack.c.h.b16 %v889
    %v996 = vunpack.c.l.b16 %v890
    %v997 = vunpack.c.h.b16 %v890
    %v998 = vunpack.c.l.b16 %v891
    %v999 = vunpack.c.h.b16 %v891
    %v1000 = vpack.c.b16 %v938, %v936
    %v1001 = vpack.c.b16 %v939, %v937
    %v1002 = vpack.c.b16 %v942, %v940
    %v1003 = vpack.c.b16 %v943, %v941
    %v1004 = vpack.c.b16 %v946, %v944
    %v1005 = vpack.c.b16 %v947, %v945
    %v1006 = vpack.c.b16 %v950, %v948
    %v1007 = vpack.c.b16 %v951, %v949
    %v1008 = vpack.c.b16 %v954, %v952
    %v1009 = vpack.c.b16 %v955, %v953
    %v1010 = vpack.c.b16 %v958, %v956
    %v1011 = vpack.c.b16 %v959, %v957
    %v1012 = vpack.c.b16 %v962, %v960
    %v1013 = vpack.c.b16 %v963, %v961
    %v1014 = vpack.c.b16 %v966, %v964
    %v1015 = vpack.c.b16 %v967, %v965
    %v1016 = vpack.c.b16 %v970, %v968
    %v1017 = vpack.c.b16 %v971, %v969
    %v1018 = vpack.c.b16 %v974, %v972
    %v1019 = vpack.c.b16 %v975, %v973
    %v1020 = vpack.c.b16 %v978, %v976
    %v1021 = vpack.c.b16 %v979, %v977
    %v1022 = vpack.c.b16 %v982, %v980
    %v1023 = vpack.c.b16 %v983, %v981
    %v1024 = vpack.c.b16 %v986, %v984
    %v1025 = vpack.c.b16 %v987, %v985
    %v1026 = vpack.c.b16 %v990, %v988
    %v1027 = vpack.c.b16 %v991, %v989
    %v1028 = vpack.c.b16 %v994, %v992
    %v1029 = vpack.c.b16 %v995, %v993
    %v1030 = vpack.c.b16 %v998, %v996
    %v1031 = vpack.c.b16 %v999, %v997
    %1064 = vmatprep.subr.bf16.mxu0 %v1001
    %1065 = vmatpush1.bf16.msra.mxu0 %v1000
    %1066 = vmatprep.subr.bf16.mxu0 %v1003
    %1067 = vmatpush1.bf16.msra.mxu0 %v1002
    %1068 = vmatprep.subr.bf16.mxu0 %v1005
    %1069 = vmatpush1.bf16.msra.mxu0 %v1004
    %1070 = vmatprep.subr.bf16.mxu0 %v1007
    %1071 = vmatpush1.bf16.msra.mxu0 %v1006
    %1072 = vmatprep.subr.bf16.mxu0 %v1009
    %1073 = vmatpush1.bf16.msra.mxu0 %v1008
    %1074 = vmatprep.subr.bf16.mxu0 %v1011
    %1075 = vmatpush1.bf16.msra.mxu0 %v1010
    %1076 = vmatprep.subr.bf16.mxu0 %v1013
    %1077 = vmatpush1.bf16.msra.mxu0 %v1012
    %1078 = vmatprep.subr.bf16.mxu0 %v1015
    %1079 = vmatpush1.bf16.msra.mxu0 %v1014
    %1080 = vmatprep.subr.bf16.mxu0 %v1017
    %1081 = vmatpush1.bf16.msra.mxu0 %v1016
    %1082 = vmatprep.subr.bf16.mxu0 %v1019
    %1083 = vmatpush1.bf16.msra.mxu0 %v1018
    %1084 = vmatprep.subr.bf16.mxu0 %v1021
    %1085 = vmatpush1.bf16.msra.mxu0 %v1020
    %1086 = vmatprep.subr.bf16.mxu0 %v1023
    %1087 = vmatpush1.bf16.msra.mxu0 %v1022
    %1088 = vmatprep.subr.bf16.mxu0 %v1025
    %1089 = vmatpush1.bf16.msra.mxu0 %v1024
    %1090 = vmatprep.subr.bf16.mxu0 %v1027
    %1091 = vmatpush1.bf16.msra.mxu0 %v1026
    %1092 = vmatprep.subr.bf16.mxu0 %v1029
    %1093 = vmatpush1.bf16.msra.mxu0 %v1028
    %1094 = vmatprep.subr.bf16.mxu0 %v1031
    %1095 = vmatpush1.bf16.msra.mxu0 %v1030
    %1096 = vmatprep.mubr.bf16.mxu0 %v859
    %1097 = vmatmul.mubr.bf16.gmra.mrb[0].mxu0 %v858
    %v1098 = vpop.f32.mrb[0].mxu0
    %v1099 = vadd.f32 %v897, %v1098
    %v1100 = vpop.f32.mrb[0].mxu0
    %v1101 = vadd.f32 %v901, %v1100
    %v1102 = vpop.f32.mrb[0].mxu0
    %v1103 = vpop.f32.mrb[0].mxu0
    %1104 = vdwg.mxu0
    %v1105 = vmax.f32 %v1099, 0.0
    %v1106 = vmax.f32 %v1101, 0.0
    %v1107 = vpack.c.bf16 %v1105, %v1105
    %v1108 = vpack.c.bf16 %v1106, %v1106
    %v1109 = vld [vmem:[#allocation4] sm:$0xff]
    %v1110 = vld [vmem:[#allocation4 + $0x8] sm:$0xff]
    %v1111 = vld [vmem:[#allocation4 + $0x10] sm:$0xff]
    %v1112 = vld [vmem:[#allocation4 + $0x18] sm:$0xff]
    %v1113 = vld [vmem:[#allocation4 + $0x20] sm:$0xff]
    %v1114 = vld [vmem:[#allocation4 + $0x28] sm:$0xff]
    %v1115 = vld [vmem:[#allocation4 + $0x30] sm:$0xff]
    %v1116 = vld [vmem:[#allocation4 + $0x38] sm:$0xff]
    %v1117 = vld [vmem:[#allocation4 + $0x40] sm:$0xff]
    %v1118 = vld [vmem:[#allocation4 + $0x48] sm:$0xff]
    %v1119 = vld [vmem:[#allocation4 + $0x50] sm:$0xff]
    %v1120 = vld [vmem:[#allocation4 + $0x58] sm:$0xff]
    %v1121 = vld [vmem:[#allocation4 + $0x60] sm:$0xff]
    %v1122 = vld [vmem:[#allocation4 + $0x68] sm:$0xff]
    %v1123 = vld [vmem:[#allocation4 + $0x70] sm:$0xff]
    %v1124 = vld [vmem:[#allocation4 + $0x78] sm:$0xff]
    %v1125 = vld [vmem:[#allocation4 + $0x80] sm:$0xff]
    %v1126 = vld [vmem:[#allocation4 + $0x88] sm:$0xff]
    %v1127 = vld [vmem:[#allocation4 + $0x90] sm:$0xff]
    %v1128 = vld [vmem:[#allocation4 + $0x98] sm:$0xff]
    %v1129 = vld [vmem:[#allocation4 + $0xa0] sm:$0xff]
    %v1130 = vld [vmem:[#allocation4 + $0xa8] sm:$0xff]
    %v1131 = vld [vmem:[#allocation4 + $0xb0] sm:$0xff]
    %v1132 = vld [vmem:[#allocation4 + $0xb8] sm:$0xff]
    %v1133 = vld [vmem:[#allocation4 + $0xc0] sm:$0xff]
    %v1134 = vld [vmem:[#allocation4 + $0xc8] sm:$0xff]
    %v1135 = vld [vmem:[#allocation4 + $0xd0] sm:$0xff]
    %v1136 = vld [vmem:[#allocation4 + $0xd8] sm:$0xff]
    %v1137 = vld [vmem:[#allocation4 + $0xe0] sm:$0xff]
    %v1138 = vld [vmem:[#allocation4 + $0xe8] sm:$0xff]
    %v1139 = vld [vmem:[#allocation4 + $0xf0] sm:$0xff]
    %v1140 = vld [vmem:[#allocation4 + $0xf8] sm:$0xff]
    %v1141 = vld [vmem:[%s6] sm:$0x3]
    %v1143 = vlaneseq
    %v1144 = vshrl.u32 %v1143, 7
    %v1145 = vsub.s32 0, %v1144
    %v1146 = vrot.slane %v1141, %v1145
    %v1147 = vlaneseq
    %v1148 = vshrl.u32 %v1147, 7
    %v1149 = vsub.s32 1, %v1148
    %v1150 = vrot.slane %v1141, %v1149
    %v1185 = vunpack.c.l.b16 %v1109
    %v1186 = vunpack.c.h.b16 %v1109
    %v1187 = vunpack.c.l.b16 %v1110
    %v1188 = vunpack.c.h.b16 %v1110
    %v1189 = vunpack.c.l.b16 %v1111
    %v1190 = vunpack.c.h.b16 %v1111
    %v1191 = vunpack.c.l.b16 %v1112
    %v1192 = vunpack.c.h.b16 %v1112
    %v1193 = vunpack.c.l.b16 %v1113
    %v1194 = vunpack.c.h.b16 %v1113
    %v1195 = vunpack.c.l.b16 %v1114
    %v1196 = vunpack.c.h.b16 %v1114
    %v1197 = vunpack.c.l.b16 %v1115
    %v1198 = vunpack.c.h.b16 %v1115
    %v1199 = vunpack.c.l.b16 %v1116
    %v1200 = vunpack.c.h.b16 %v1116
    %v1201 = vunpack.c.l.b16 %v1117
    %v1202 = vunpack.c.h.b16 %v1117
    %v1203 = vunpack.c.l.b16 %v1118
    %v1204 = vunpack.c.h.b16 %v1118
    %v1205 = vunpack.c.l.b16 %v1119
    %v1206 = vunpack.c.h.b16 %v1119
    %v1207 = vunpack.c.l.b16 %v1120
    %v1208 = vunpack.c.h.b16 %v1120
    %v1209 = vunpack.c.l.b16 %v1121
    %v1210 = vunpack.c.h.b16 %v1121
    %v1211 = vunpack.c.l.b16 %v1122
    %v1212 = vunpack.c.h.b16 %v1122
    %v1213 = vunpack.c.l.b16 %v1123
    %v1214 = vunpack.c.h.b16 %v1123
    %v1215 = vunpack.c.l.b16 %v1124
    %v1216 = vunpack.c.h.b16 %v1124
    %v1217 = vunpack.c.l.b16 %v1125
    %v1218 = vunpack.c.h.b16 %v1125
    %v1219 = vunpack.c.l.b16 %v1126
    %v1220 = vunpack.c.h.b16 %v1126
    %v1221 = vunpack.c.l.b16 %v1127
    %v1222 = vunpack.c.h.b16 %v1127
    %v1223 = vunpack.c.l.b16 %v1128
    %v1224 = vunpack.c.h.b16 %v1128
    %v1225 = vunpack.c.l.b16 %v1129
    %v1226 = vunpack.c.h.b16 %v1129
    %v1227 = vunpack.c.l.b16 %v1130
    %v1228 = vunpack.c.h.b16 %v1130
    %v1229 = vunpack.c.l.b16 %v1131
    %v1230 = vunpack.c.h.b16 %v1131
    %v1231 = vunpack.c.l.b16 %v1132
    %v1232 = vunpack.c.h.b16 %v1132
    %v1233 = vunpack.c.l.b16 %v1133
    %v1234 = vunpack.c.h.b16 %v1133
    %v1235 = vunpack.c.l.b16 %v1134
    %v1236 = vunpack.c.h.b16 %v1134
    %v1237 = vunpack.c.l.b16 %v1135
    %v1238 = vunpack.c.h.b16 %v1135
    %v1239 = vunpack.c.l.b16 %v1136
    %v1240 = vunpack.c.h.b16 %v1136
    %v1241 = vunpack.c.l.b16 %v1137
    %v1242 = vunpack.c.h.b16 %v1137
    %v1243 = vunpack.c.l.b16 %v1138
    %v1244 = vunpack.c.h.b16 %v1138
    %v1245 = vunpack.c.l.b16 %v1139
    %v1246 = vunpack.c.h.b16 %v1139
    %v1247 = vunpack.c.l.b16 %v1140
    %v1248 = vunpack.c.h.b16 %v1140
    %v1249 = vpack.c.b16 %v1187, %v1185
    %v1250 = vpack.c.b16 %v1188, %v1186
    %v1251 = vpack.c.b16 %v1191, %v1189
    %v1252 = vpack.c.b16 %v1192, %v1190
    %v1253 = vpack.c.b16 %v1195, %v1193
    %v1254 = vpack.c.b16 %v1196, %v1194
    %v1255 = vpack.c.b16 %v1199, %v1197
    %v1256 = vpack.c.b16 %v1200, %v1198
    %v1257 = vpack.c.b16 %v1203, %v1201
    %v1258 = vpack.c.b16 %v1204, %v1202
    %v1259 = vpack.c.b16 %v1207, %v1205
    %v1260 = vpack.c.b16 %v1208, %v1206
    %v1261 = vpack.c.b16 %v1211, %v1209
    %v1262 = vpack.c.b16 %v1212, %v1210
    %v1263 = vpack.c.b16 %v1215, %v1213
    %v1264 = vpack.c.b16 %v1216, %v1214
    %v1265 = vpack.c.b16 %v1219, %v1217
    %v1266 = vpack.c.b16 %v1220, %v1218
    %v1267 = vpack.c.b16 %v1223, %v1221
    %v1268 = vpack.c.b16 %v1224, %v1222
    %v1269 = vpack.c.b16 %v1227, %v1225
    %v1270 = vpack.c.b16 %v1228, %v1226
    %v1271 = vpack.c.b16 %v1231, %v1229
    %v1272 = vpack.c.b16 %v1232, %v1230
    %v1273 = vpack.c.b16 %v1235, %v1233
    %v1274 = vpack.c.b16 %v1236, %v1234
    %v1275 = vpack.c.b16 %v1239, %v1237
    %v1276 = vpack.c.b16 %v1240, %v1238
    %v1277 = vpack.c.b16 %v1243, %v1241
    %v1278 = vpack.c.b16 %v1244, %v1242
    %v1279 = vpack.c.b16 %v1247, %v1245
    %v1280 = vpack.c.b16 %v1248, %v1246
    %1313 = vmatprep.subr.bf16.mxu0 %v1250
    %1314 = vmatpush1.bf16.msra.mxu0 %v1249
    %1315 = vmatprep.subr.bf16.mxu0 %v1252
    %1316 = vmatpush1.bf16.msra.mxu0 %v1251
    %1317 = vmatprep.subr.bf16.mxu0 %v1254
    %1318 = vmatpush1.bf16.msra.mxu0 %v1253
    %1319 = vmatprep.subr.bf16.mxu0 %v1256
    %1320 = vmatpush1.bf16.msra.mxu0 %v1255
    %1321 = vmatprep.subr.bf16.mxu0 %v1258
    %1322 = vmatpush1.bf16.msra.mxu0 %v1257
    %1323 = vmatprep.subr.bf16.mxu0 %v1260
    %1324 = vmatpush1.bf16.msra.mxu0 %v1259
    %1325 = vmatprep.subr.bf16.mxu0 %v1262
    %1326 = vmatpush1.bf16.msra.mxu0 %v1261
    %1327 = vmatprep.subr.bf16.mxu0 %v1264
    %1328 = vmatpush1.bf16.msra.mxu0 %v1263
    %1329 = vmatprep.subr.bf16.mxu0 %v1266
    %1330 = vmatpush1.bf16.msra.mxu0 %v1265
    %1331 = vmatprep.subr.bf16.mxu0 %v1268
    %1332 = vmatpush1.bf16.msra.mxu0 %v1267
    %1333 = vmatprep.subr.bf16.mxu0 %v1270
    %1334 = vmatpush1.bf16.msra.mxu0 %v1269
    %1335 = vmatprep.subr.bf16.mxu0 %v1272
    %1336 = vmatpush1.bf16.msra.mxu0 %v1271
    %1337 = vmatprep.subr.bf16.mxu0 %v1274
    %1338 = vmatpush1.bf16.msra.mxu0 %v1273
    %1339 = vmatprep.subr.bf16.mxu0 %v1276
    %1340 = vmatpush1.bf16.msra.mxu0 %v1275
    %1341 = vmatprep.subr.bf16.mxu0 %v1278
    %1342 = vmatpush1.bf16.msra.mxu0 %v1277
    %1343 = vmatprep.subr.bf16.mxu0 %v1280
    %1344 = vmatpush1.bf16.msra.mxu0 %v1279
    %1345 = vmatprep.mubr.bf16.mxu0 %v1108
    %1346 = vmatmul.mubr.bf16.gmra.mrb[0].mxu0 %v1107
    %v1347 = vpop.f32.mrb[0].mxu0
    %v1348 = vadd.f32 %v1146, %v1347
    %v1349 = vpop.f32.mrb[0].mxu0
    %v1350 = vadd.f32 %v1150, %v1349
    %v1351 = vpop.f32.mrb[0].mxu0
    %v1352 = vpop.f32.mrb[0].mxu0
    %1353 = vdwg.mxu0
    %v1354 = vmax.f32 %v1348, 0.0
    %v1355 = vmax.f32 %v1350, 0.0
    %v1356 = vpack.c.bf16 %v1354, %v1354
    %v1357 = vpack.c.bf16 %v1355, %v1355
    %v1358 = vld [vmem:[#allocation6] sm:$0xf]
    %v1359 = vld [vmem:[#allocation6 + $0x4] sm:$0xf]
    %v1360 = vld [vmem:[#allocation6 + $0x8] sm:$0xf]
    %v1361 = vld [vmem:[#allocation6 + $0xc] sm:$0xf]
    %v1362 = vld [vmem:[#allocation6 + $0x10] sm:$0xf]
    %v1363 = vld [vmem:[#allocation6 + $0x14] sm:$0xf]
    %v1364 = vld [vmem:[#allocation6 + $0x18] sm:$0xf]
    %v1365 = vld [vmem:[#allocation6 + $0x1c] sm:$0xf]
    %v1366 = vld [vmem:[#allocation6 + $0x20] sm:$0xf]
    %v1367 = vld [vmem:[#allocation6 + $0x24] sm:$0xf]
    %v1368 = vld [vmem:[#allocation6 + $0x28] sm:$0xf]
    %v1369 = vld [vmem:[#allocation6 + $0x2c] sm:$0xf]
    %v1370 = vld [vmem:[#allocation6 + $0x30] sm:$0xf]
    %v1371 = vld [vmem:[#allocation6 + $0x34] sm:$0xf]
    %v1372 = vld [vmem:[#allocation6 + $0x38] sm:$0xf]
    %v1373 = vld [vmem:[#allocation6 + $0x3c] sm:$0xf]
    %v1374 = vld [vmem:[#allocation6 + $0x40] sm:$0xf]
    %v1375 = vld [vmem:[#allocation6 + $0x44] sm:$0xf]
    %v1376 = vld [vmem:[#allocation6 + $0x48] sm:$0xf]
    %v1377 = vld [vmem:[#allocation6 + $0x4c] sm:$0xf]
    %v1378 = vld [vmem:[#allocation6 + $0x50] sm:$0xf]
    %v1379 = vld [vmem:[#allocation6 + $0x54] sm:$0xf]
    %v1380 = vld [vmem:[#allocation6 + $0x58] sm:$0xf]
    %v1381 = vld [vmem:[#allocation6 + $0x5c] sm:$0xf]
    %v1382 = vld [vmem:[#allocation6 + $0x60] sm:$0xf]
    %v1383 = vld [vmem:[#allocation6 + $0x64] sm:$0xf]
    %v1384 = vld [vmem:[#allocation6 + $0x68] sm:$0xf]
    %v1385 = vld [vmem:[#allocation6 + $0x6c] sm:$0xf]
    %v1386 = vld [vmem:[#allocation6 + $0x70] sm:$0xf]
    %v1387 = vld [vmem:[#allocation6 + $0x74] sm:$0xf]
    %v1388 = vld [vmem:[#allocation6 + $0x78] sm:$0xf]
    %v1389 = vld [vmem:[#allocation6 + $0x7c] sm:$0xf]
    %v1390 = vld [vmem:[%s8] sm:$0x1]
    %v1392 = vlaneseq
    %v1393 = vshrl.u32 %v1392, 7
    %v1394 = vsub.s32 0, %v1393
    %v1395 = vrot.slane %v1390, %v1394
    %v1429 = vunpack.c.l.b16 %v1358
    %v1430 = vunpack.c.l.b16 %v1359
    %v1431 = vunpack.c.l.b16 %v1360
    %v1432 = vunpack.c.l.b16 %v1361
    %v1433 = vunpack.c.l.b16 %v1362
    %v1434 = vunpack.c.l.b16 %v1363
    %v1435 = vunpack.c.l.b16 %v1364
    %v1436 = vunpack.c.l.b16 %v1365
    %v1437 = vunpack.c.l.b16 %v1366
    %v1438 = vunpack.c.l.b16 %v1367
    %v1439 = vunpack.c.l.b16 %v1368
    %v1440 = vunpack.c.l.b16 %v1369
    %v1441 = vunpack.c.l.b16 %v1370
    %v1442 = vunpack.c.l.b16 %v1371
    %v1443 = vunpack.c.l.b16 %v1372
    %v1444 = vunpack.c.l.b16 %v1373
    %v1445 = vunpack.c.l.b16 %v1374
    %v1446 = vunpack.c.l.b16 %v1375
    %v1447 = vunpack.c.l.b16 %v1376
    %v1448 = vunpack.c.l.b16 %v1377
    %v1449 = vunpack.c.l.b16 %v1378
    %v1450 = vunpack.c.l.b16 %v1379
    %v1451 = vunpack.c.l.b16 %v1380
    %v1452 = vunpack.c.l.b16 %v1381
    %v1453 = vunpack.c.l.b16 %v1382
    %v1454 = vunpack.c.l.b16 %v1383
    %v1455 = vunpack.c.l.b16 %v1384
    %v1456 = vunpack.c.l.b16 %v1385
    %v1457 = vunpack.c.l.b16 %v1386
    %v1458 = vunpack.c.l.b16 %v1387
    %v1459 = vunpack.c.l.b16 %v1388
    %v1460 = vunpack.c.l.b16 %v1389
    %v1461 = vpack.c.b16 %v1430, %v1429
    %v1462 = vpack.c.b16 %v1432, %v1431
    %v1463 = vpack.c.b16 %v1434, %v1433
    %v1464 = vpack.c.b16 %v1436, %v1435
    %v1465 = vpack.c.b16 %v1438, %v1437
    %v1466 = vpack.c.b16 %v1440, %v1439
    %v1467 = vpack.c.b16 %v1442, %v1441
    %v1468 = vpack.c.b16 %v1444, %v1443
    %v1469 = vpack.c.b16 %v1446, %v1445
    %v1470 = vpack.c.b16 %v1448, %v1447
    %v1471 = vpack.c.b16 %v1450, %v1449
    %v1472 = vpack.c.b16 %v1452, %v1451
    %v1473 = vpack.c.b16 %v1454, %v1453
    %v1474 = vpack.c.b16 %v1456, %v1455
    %v1475 = vpack.c.b16 %v1458, %v1457
    %v1476 = vpack.c.b16 %v1460, %v1459
    %1493 = vmatprep.subr.bf16.mxu0 0
    %1494 = vmatpush1.bf16.msra.mxu0 %v1461
    %1495 = vmatprep.subr.bf16.mxu0 0
    %1496 = vmatpush1.bf16.msra.mxu0 %v1462
    %1497 = vmatprep.subr.bf16.mxu0 0
    %1498 = vmatpush1.bf16.msra.mxu0 %v1463
    %1499 = vmatprep.subr.bf16.mxu0 0
    %1500 = vmatpush1.bf16.msra.mxu0 %v1464
    %1501 = vmatprep.subr.bf16.mxu0 0
    %1502 = vmatpush1.bf16.msra.mxu0 %v1465
    %1503 = vmatprep.subr.bf16.mxu0 0
    %1504 = vmatpush1.bf16.msra.mxu0 %v1466
    %1505 = vmatprep.subr.bf16.mxu0 0
    %1506 = vmatpush1.bf16.msra.mxu0 %v1467
    %1507 = vmatprep.subr.bf16.mxu0 0
    %1508 = vmatpush1.bf16.msra.mxu0 %v1468
    %1509 = vmatprep.subr.bf16.mxu0 0
    %1510 = vmatpush1.bf16.msra.mxu0 %v1469
    %1511 = vmatprep.subr.bf16.mxu0 0
    %1512 = vmatpush1.bf16.msra.mxu0 %v1470
    %1513 = vmatprep.subr.bf16.mxu0 0
    %1514 = vmatpush1.bf16.msra.mxu0 %v1471
    %1515 = vmatprep.subr.bf16.mxu0 0
    %1516 = vmatpush1.bf16.msra.mxu0 %v1472
    %1517 = vmatprep.subr.bf16.mxu0 0
    %1518 = vmatpush1.bf16.msra.mxu0 %v1473
    %1519 = vmatprep.subr.bf16.mxu0 0
    %1520 = vmatpush1.bf16.msra.mxu0 %v1474
    %1521 = vmatprep.subr.bf16.mxu0 0
    %1522 = vmatpush1.bf16.msra.mxu0 %v1475
    %1523 = vmatprep.subr.bf16.mxu0 0
    %1524 = vmatpush1.bf16.msra.mxu0 %v1476
    %1525 = vmatprep.mubr.bf16.mxu0 %v1357
    %1526 = vmatmul.mubr.bf16.gmra.mrb[0].mxu0 %v1356
    %v1527 = vpop.f32.mrb[0].mxu0
    %v1528 = vadd.f32 %v1395, %v1527
    %v1529 = vpop.f32.mrb[0].mxu0
    %v1530 = vpop.f32.mrb[0].mxu0
    %v1531 = vpop.f32.mrb[0].mxu0
    %1532 = vdwg.mxu0
    %v1533 = vpack.c.bf16 %v1528, %v1528
    %1534 = vst [vmem:[%s9] sm:$0xf] %v1533
    // Predicated region
    $region50: #{mlp_forward.1} parent=1 // pred_check
      _
    $region51: #{mlp_forward.1} parent=1 // pred_check_branch
      %1536 = sbr.rel (0) target = $region53
    $region52: #{mlp_forward.1} parent=1 // pred_region
      _
    $region53: #{mlp_forward.1} parent=1 // pred_fallthru
      _
    // Predicated region
    $region54: #{mlp_forward.1} parent=1 // pred_check
      _
    $region55: #{mlp_forward.1} parent=1 // pred_check_branch
      %1538 = sbr.rel (0) target = $region57
    $region56: #{mlp_forward.1} parent=1 // pred_region
      _
    $region57: #{mlp_forward.1} parent=1 // pred_fallthru
      _
    %1539 = vsyncpa [#allocation3], 1
    %1540 = vsyncpa [#allocation5], 1

</llo_original>
